<compile_context>
chip_gen: v5e
topology: v5e:2x2
jax: 0.10.0
libtpu: 0.0.40
codegen_flags: <defaults>
</compile_context>

<pallas_src>
import functools

import jax
import jax.numpy as jnp
from jax import lax
from jax.experimental import pallas as pl
from jax.experimental.pallas import tpu as pltpu


def _bn_kernel(x_ref, w_ref, b_ref, y_ref, mean_ref, var_ref,
               sum_s, sumsq_s, m0_s, scale_s, shift_s,
               *, eps, inv_count, low_precision_norm):
    """Two-phase batch-norm over one channel tile.

    Grid axes: (channel tile i [parallel], phase p [arbitrary], spatial tile s
    [arbitrary]).  Phase 0 accumulates shifted sum / sumsq; its last step folds
    mean/var and the shared affine into per-channel scale/shift and emits the
    batch stats.  Phase 1 normalizes: y = x * scale + shift.
    """
    phase = pl.program_id(1)
    s = pl.program_id(2)

    @pl.when(phase == 0)
    def _stats():
        @pl.when(s == 0)
        def _init():
            # Per-channel shift (mean of sample 0's first spatial tile) keeps
            # E[x^2] - E[x]^2 well conditioned when |mean| >> std.
            row0 = x_ref[0:1, :, :].astype(jnp.float32)          # (1, Ct, HWt)
            m0_s[...] = jnp.sum(row0, axis=2, keepdims=True) * (1.0 / row0.shape[2])
            sum_s[...] = jnp.zeros(sum_s.shape, jnp.float32)
            sumsq_s[...] = jnp.zeros(sumsq_s.shape, jnp.float32)

        xs = x_ref[...].astype(jnp.float32) - m0_s[...]          # (N, Ct, HWt)
        sum_s[...] += jnp.sum(jnp.sum(xs, axis=2, keepdims=True),
                              axis=0, keepdims=True)
        sumsq_s[...] += jnp.sum(jnp.sum(xs * xs, axis=2, keepdims=True),
                                axis=0, keepdims=True)

        @pl.when(s == pl.num_programs(2) - 1)
        def _finalize():
            d = sum_s[...] * inv_count
            mean = m0_s[...] + d
            var = jnp.maximum(sumsq_s[...] * inv_count - d * d, 0.0)  # biased var
            inv_std = lax.rsqrt(var + eps)
            scale = inv_std * w_ref[...]
            scale_s[...] = scale
            shift_s[...] = b_ref[...] - mean * scale
            mean_ref[...] = mean
            var_ref[...] = var

    @pl.when(phase == 1)
    def _normalize():
        if low_precision_norm:
            # bf16 VPU path (v6e/v7x): one mul + one add per element in bf16.
            x = x_ref[...]
            y_ref[...] = x * scale_s[...].astype(x.dtype) + shift_s[...].astype(x.dtype)
        else:
            xf = x_ref[...].astype(jnp.float32)
            y_ref[...] = (xf * scale_s[...] + shift_s[...]).astype(y_ref.dtype)


def _tpu_generation():
    try:
        kind = jax.devices()[0].device_kind.lower()
    except Exception:
        return 0
    for tag, gen in (("v7", 7), ("v6", 6), ("v5", 5), ("v4", 4), ("v3", 3), ("v2", 2)):
        if tag in kind:
            return gen
    return 0


def _vmem_capacity_bytes(gen):
    try:
        cap = getattr(pltpu.get_tpu_info(), "vmem_capacity_bytes", None)
        if cap:
            return int(cap)
    except Exception:
        pass
    return (64 << 20) if gen >= 7 else (128 << 20)


def _plan_tiles(N, C, HW, itemsize, budget_bytes, gen, min_steps=4):
    """Pick (c_tile, hw_tile) so the true per-step VMEM footprint fits budget.

    Footprint = double-buffered x-in + y-out blocks (I/O dtype) + ~2x block of
    f32 elementwise temporaries (phase 0) + padded (1, Ct, 1) per-channel
    scratch / stat / weight buffers.
    """
    sub = {4: 8, 2: 16, 1: 32}.get(itemsize, 8)

    def footprint(ct, hwt):
        io = 4 * N * ct * hwt * itemsize        # 2x double-buffered in + 2x out
        work = 2 * N * ct * hwt * 4             # f32 intermediates in phase 0
        aux = 13 * ct * 512                     # padded (1,ct,1) scratch/stats/w/b
        return io + work + aux

    ct_cands = sorted({d for d in range(sub, C, sub) if C % d == 0} | {C},
                      reverse=True)

    def pick_ct(hwt, n_hw):
        fitting = [ct for ct in ct_cands if footprint(ct, hwt) <= budget_bytes]
        if not fitting:
            return None
        # Mild preference for enough grid steps to keep the DMA pipeline busy.
        pref = [ct for ct in fitting if (C // ct) * 2 * n_hw >= min_steps]
        pool = pref if pref else fitting
        if gen >= 7:
            # Let v7x's two TensorCores split the parallel channel axis evenly.
            even = [ct for ct in pool if (C // ct) >= 2 and (C // ct) % 2 == 0]
            pool = even if even else pool
        return max(pool)

    ct = pick_ct(HW, 1)
    if ct is not None:
        return ct, HW, footprint(ct, HW)

    # Spatial split: even the minimal channel tile over the full (N, HW) extent
    # exceeds the budget (maskrcnn stem-scale features, v7x's 64 MiB VMEM).
    hw_cands = [h for h in range(128, HW, 128) if HW % h == 0]
    for hwt in sorted(hw_cands, reverse=True):
        ct = pick_ct(hwt, HW // hwt)
        if ct is not None:
            return ct, hwt, footprint(ct, hwt)

    # TODO(synk): H*W not factorable into 128-multiples (or still over budget):
    # fall back to the smallest legal channel tile over the full spatial extent;
    # a masked/padded spatial tile would be needed to split further.
    ct = min(ct_cands)
    return ct, HW, footprint(ct, HW)


def shared_batch_norm_forward(x_nchw, weight, bias, running_mean, running_var,
                              share_id, *, eps=1e-5, momentum=0.1,
                              vmem_budget_bytes=None):
    """Training-mode forward of _SharedBatchNorm.

    x_nchw:       (N, C, H, W), any float dtype (kept as kernel I/O dtype)
    weight, bias: (C,)   -- shared across all share groups
    running_mean, running_var: (num_shared, C)
    Returns (result_nchw, new_running_mean, new_running_var).
    """
    N, C, H, W = x_nchw.shape
    HW = H * W
    L = N * HW
    itemsize = jnp.dtype(x_nchw.dtype).itemsize

    gen = _tpu_generation()
    phys_vmem = _vmem_capacity_bytes(gen)
    if vmem_budget_bytes is None:
        # <= ~48 MiB total on v7x (64 MiB physical per TC); up to ~96 MiB on the
        # 128 MiB-VMEM parts (bigger blocks -> closer to HBM roofline).
        cap = (48 << 20) if gen >= 7 else (96 << 20)
        vmem_budget_bytes = min(cap, (phys_vmem * 3) // 4)

    c_tile, hw_tile, fp = _plan_tiles(N, C, HW, itemsize, vmem_budget_bytes, gen)
    n_ctiles = C // c_tile
    n_hw = HW // hw_tile

    # vmem_limit derived from the computed footprint + headroom, clamped to chip.
    vmem_limit = int(fp + max(fp // 2, 8 << 20))
    vmem_limit = max(vmem_limit, 16 << 20)
    vmem_limit = min(vmem_limit, phys_vmem - (4 << 20))
    vmem_limit = max(vmem_limit, fp + (2 << 20))

    # bf16 normalize pass only where the VPU has bf16 lanes (v6e/v7x).
    low_prec = bool(x_nchw.dtype == jnp.bfloat16 and gen >= 6)

    x_v = x_nchw.reshape(N, C, HW)                       # free NCHW view
    w_v = weight.reshape(1, C, 1).astype(jnp.float32)
    b_v = bias.reshape(1, C, 1).astype(jnp.float32)

    kernel = functools.partial(_bn_kernel, eps=float(eps),
                               inv_count=1.0 / float(L),
                               low_precision_norm=low_prec)

    y_v, bm, bv = pl.pallas_call(
        kernel,
        out_shape=(
            jax.ShapeDtypeStruct((N, C, HW), x_nchw.dtype),
            jax.ShapeDtypeStruct((1, C, 1), jnp.float32),
            jax.ShapeDtypeStruct((1, C, 1), jnp.float32),
        ),
        grid=(n_ctiles, 2, n_hw),
        in_specs=[
            pl.BlockSpec((N, c_tile, hw_tile), lambda i, p, s: (0, i, s)),
            pl.BlockSpec((1, c_tile, 1), lambda i, p, s: (0, i, 0)),
            pl.BlockSpec((1, c_tile, 1), lambda i, p, s: (0, i, 0)),
        ],
        out_specs=(
            # Phase 0 parks the output index on (i, 0); no flush happens until
            # phase 1 has overwritten it, so each y block hits HBM exactly once.
            pl.BlockSpec((N, c_tile, hw_tile), lambda i, p, s: (0, i, p * s)),
            pl.BlockSpec((1, c_tile, 1), lambda i, p, s: (0, i, 0)),
            pl.BlockSpec((1, c_tile, 1), lambda i, p, s: (0, i, 0)),
        ),
        scratch_shapes=[pltpu.VMEM((1, c_tile, 1), jnp.float32) for _ in range(5)],
        compiler_params=pltpu.CompilerParams(
            dimension_semantics=("parallel", "arbitrary", "arbitrary"),
            vmem_limit_bytes=vmem_limit,
        ),
    )(x_v, w_v, b_v)

    result = y_v.reshape(N, C, H, W)                     # free reshape back

    # Running-stat update (nn.Module buffer state -> functional JAX glue),
    # matching F.batch_norm training update: unbiased variance, EAF = momentum.
    # Note: for L == 1 we use max(L-1, 1), i.e. running_var gets the biased
    # (zero) variance instead of PyTorch's NaN -- deliberate, documented.
    bm = bm.reshape(C)
    bv_unbiased = bv.reshape(C) * (L / max(L - 1, 1))
    new_rm = running_mean.at[share_id].set(
        (1.0 - momentum) * running_mean[share_id] + momentum * bm)
    new_rv = running_var.at[share_id].set(
        (1.0 - momentum) * running_var[share_id] + momentum * bv_unbiased)
    return result, new_rm, new_rv


if __name__ == "__main__":
    key = jax.random.PRNGKey(0)
    num_shared = 3
    share_id = 1
    eps = 1e-5
    momentum = 0.1

    def reference(x, weight, bias):
        xf = x.astype(jnp.float32)
        mean = jnp.mean(xf, axis=(0, 2, 3), keepdims=True)
        var = jnp.mean((xf - mean) ** 2, axis=(0, 2, 3), keepdims=True)
        y = (xf - mean) / jnp.sqrt(var + eps)
        return y * weight.reshape(1, -1, 1, 1) + bias.reshape(1, -1, 1, 1)

    def run_case(shape, dtype, budget, tol):
        N, C, H, W = shape
        kx, kw, kb = jax.random.split(jax.random.fold_in(key, C * H * W), 3)
        x = (jax.random.normal(kx, shape, jnp.float32) * 2.0 + 0.5).astype(dtype)
        weight = jax.random.normal(kw, (C,), jnp.float32) * 0.1 + 1.0
        bias = jax.random.normal(kb, (C,), jnp.float32) * 0.1
        rm = jnp.zeros((num_shared, C), jnp.float32)
        rv = jnp.ones((num_shared, C), jnp.float32)

        out, nrm, nrv = shared_batch_norm_forward(
            x, weight, bias, rm, rv, share_id, eps=eps, momentum=momentum,
            vmem_budget_bytes=budget)
        jax.block_until_ready((out, nrm, nrv))

        assert out.shape == x.shape and out.dtype == x.dtype
        ref = reference(x, weight, bias)
        err = float(jnp.max(jnp.abs(out.astype(jnp.float32) - ref)))
        assert err < tol, f"output mismatch {err} (shape={shape}, dtype={dtype})"

        # Running-stat update check (PyTorch uses unbiased variance here).
        L = N * H * W
        xf = x.astype(jnp.float32)
        bm = jnp.mean(xf, axis=(0, 2, 3))
        bv = jnp.var(xf, axis=(0, 2, 3)) * (L / (L - 1))
        exp_rm = rm.at[share_id].set((1 - momentum) * rm[share_id] + momentum * bm)
        exp_rv = rv.at[share_id].set((1 - momentum) * rv[share_id] + momentum * bv)
        assert float(jnp.max(jnp.abs(nrm - exp_rm))) < 1e-4
        assert float(jnp.max(jnp.abs(nrv - exp_rv))) < 1e-3

    # Toy shape from the module spec; auto VMEM budget, single channel tile.
    run_case((2, 4, 16, 16), jnp.float32, None, 1e-4)
    # Small forced budget -> channel tiling (c_tile=8, 2 channel tiles).
    run_case((2, 16, 16, 16), jnp.float32, 200 * 1024, 1e-4)
    # Forced budget small enough that the spatial split-reduction path kicks in
    # (hw_tile=512, 4 spatial tiles x 2 phases per channel tile).
    run_case((2, 16, 32, 64), jnp.float32, 300 * 1024, 1e-4)
    # bf16 I/O path: f32 stats, bf16 normalize on v6e/v7x (f32 elsewhere), tiled.
    run_case((2, 32, 16, 16), jnp.bfloat16, 300 * 1024, 1.5e-1)

    print("KERNEL_OK")
</pallas_src>

<mosaic_0001>
module attributes {stable_mosaic.version = 11 : i64} {
  func.func @_bn_kernel(%arg0: i32, %arg1: i32, %arg2: i32, %arg3: memref<2x4x256xf32, #tpu.memory_space<vmem>>, %arg4: memref<1x4x1xf32, #tpu.memory_space<vmem>>, %arg5: memref<1x4x1xf32, #tpu.memory_space<vmem>>, %arg6: memref<2x4x256xf32, #tpu.memory_space<vmem>>, %arg7: memref<1x4x1xf32, #tpu.memory_space<vmem>>, %arg8: memref<1x4x1xf32, #tpu.memory_space<vmem>>, %arg9: memref<1x4x1xf32, #tpu.memory_space<vmem>>, %arg10: memref<1x4x1xf32, #tpu.memory_space<vmem>>, %arg11: memref<1x4x1xf32, #tpu.memory_space<vmem>>, %arg12: memref<1x4x1xf32, #tpu.memory_space<vmem>>, %arg13: memref<1x4x1xf32, #tpu.memory_space<vmem>>) attributes {dimension_semantics = [#tpu.dimension_semantics<parallel>, #tpu.dimension_semantics<arbitrary>, #tpu.dimension_semantics<arbitrary>], iteration_bounds = array<i64: 1, 2, 1>, scalar_prefetch = 0 : i64, scratch_operands = 5 : i64, tpu.core_type = #tpu.core_type<tc>, window_params = [{transform_indices = @transform_0, window_bounds = array<i64: 2, 4, 256>}, {transform_indices = @transform_1, window_bounds = array<i64: 1, 4, 1>}, {transform_indices = @transform_2, window_bounds = array<i64: 1, 4, 1>}, {transform_indices = @transform_3, window_bounds = array<i64: 2, 4, 256>}, {transform_indices = @transform_4, window_bounds = array<i64: 1, 4, 1>}, {transform_indices = @transform_5, window_bounds = array<i64: 1, 4, 1>}]} {
    %c0_i32 = arith.constant 0 : i32
    %0 = arith.cmpi eq, %arg1, %c0_i32 : i32
    %1 = arith.extui %0 : i1 to i32
    %c0_i32_0 = arith.constant 0 : i32
    %2 = arith.cmpi ne, %1, %c0_i32_0 : i32
    scf.if %2 {
      %c0_i32_2 = arith.constant 0 : i32
      %6 = arith.cmpi eq, %arg2, %c0_i32_2 : i32
      %7 = arith.extui %6 : i1 to i32
      %c0_i32_3 = arith.constant 0 : i32
      %8 = arith.cmpi ne, %7, %c0_i32_3 : i32
      scf.if %8 {
        %c0_26 = arith.constant 0 : index
        %c0_27 = arith.constant 0 : index
        %c0_28 = arith.constant 0 : index
        %31 = vector.load %arg3[%c0_26, %c0_27, %c0_28] : memref<2x4x256xf32, #tpu.memory_space<vmem>>, vector<1x4x256xf32>
        %cst_29 = arith.constant dense<0.000000e+00> : vector<1x4xf32>
        %32 = vector.multi_reduction <add>, %31, %cst_29 [2] : vector<1x4x256xf32> to vector<1x4xf32>
        %33 = vector.shape_cast %32 : vector<1x4xf32> to vector<1x4x1xf32>
        %cst_30 = arith.constant 3.906250e-03 : f32
        %34 = vector.broadcast %cst_30 : f32 to vector<1x4x1xf32>
        %35 = arith.mulf %33, %34 : vector<1x4x1xf32>
        %c0_31 = arith.constant 0 : index
        %c0_32 = arith.constant 0 : index
        %c0_33 = arith.constant 0 : index
        %36 = vector.load %arg11[%c0_31, %c0_32, %c0_33] : memref<1x4x1xf32, #tpu.memory_space<vmem>>, vector<1x4x1xf32>
        tpu.vector_store %arg11[%c0_31, %c0_32, %c0_33], %35 {strides = array<i32>} : memref<1x4x1xf32, #tpu.memory_space<vmem>>, vector<1x4x1xf32>,
        %cst_34 = arith.constant 0.000000e+00 : f32
        %37 = vector.broadcast %cst_34 : f32 to vector<1x4x1xf32>
        %c0_35 = arith.constant 0 : index
        %c0_36 = arith.constant 0 : index
        %c0_37 = arith.constant 0 : index
        %38 = vector.load %arg9[%c0_35, %c0_36, %c0_37] : memref<1x4x1xf32, #tpu.memory_space<vmem>>, vector<1x4x1xf32>
        tpu.vector_store %arg9[%c0_35, %c0_36, %c0_37], %37 {strides = array<i32>} : memref<1x4x1xf32, #tpu.memory_space<vmem>>, vector<1x4x1xf32>,
        %cst_38 = arith.constant 0.000000e+00 : f32
        %39 = vector.broadcast %cst_38 : f32 to vector<1x4x1xf32>
        %c0_39 = arith.constant 0 : index
        %c0_40 = arith.constant 0 : index
        %c0_41 = arith.constant 0 : index
        %40 = vector.load %arg10[%c0_39, %c0_40, %c0_41] : memref<1x4x1xf32, #tpu.memory_space<vmem>>, vector<1x4x1xf32>
        tpu.vector_store %arg10[%c0_39, %c0_40, %c0_41], %39 {strides = array<i32>} : memref<1x4x1xf32, #tpu.memory_space<vmem>>, vector<1x4x1xf32>,
      } else {
      }
      %c0 = arith.constant 0 : index
      %c0_4 = arith.constant 0 : index
      %c0_5 = arith.constant 0 : index
      %9 = vector.load %arg3[%c0, %c0_4, %c0_5] : memref<2x4x256xf32, #tpu.memory_space<vmem>>, vector<2x4x256xf32>
      %c0_6 = arith.constant 0 : index
      %c0_7 = arith.constant 0 : index
      %c0_8 = arith.constant 0 : index
      %10 = vector.load %arg11[%c0_6, %c0_7, %c0_8] : memref<1x4x1xf32, #tpu.memory_space<vmem>>, vector<1x4x1xf32>
      %11 = vector.broadcast %10 : vector<1x4x1xf32> to vector<2x4x256xf32>
      %12 = arith.subf %9, %11 : vector<2x4x256xf32>
      %c0_9 = arith.constant 0 : index
      %c0_10 = arith.constant 0 : index
      %c0_11 = arith.constant 0 : index
      %13 = vector.load %arg9[%c0_9, %c0_10, %c0_11] : memref<1x4x1xf32, #tpu.memory_space<vmem>>, vector<1x4x1xf32>
      %cst = arith.constant dense<0.000000e+00> : vector<2x4xf32>
      %14 = vector.multi_reduction <add>, %12, %cst [2] : vector<2x4x256xf32> to vector<2x4xf32>
      %15 = vector.shape_cast %14 : vector<2x4xf32> to vector<2x4x1xf32>
      %cst_12 = arith.constant dense<0.000000e+00> : vector<4x1xf32>
      %16 = vector.multi_reduction <add>, %15, %cst_12 [0] : vector<2x4x1xf32> to vector<4x1xf32>
      %17 = vector.shape_cast %16 : vector<4x1xf32> to vector<1x4x1xf32>
      %18 = arith.addf %13, %17 : vector<1x4x1xf32>
      %c0_13 = arith.constant 0 : index
      %c0_14 = arith.constant 0 : index
      %c0_15 = arith.constant 0 : index
      %19 = vector.load %arg9[%c0_13, %c0_14, %c0_15] : memref<1x4x1xf32, #tpu.memory_space<vmem>>, vector<1x4x1xf32>
      tpu.vector_store %arg9[%c0_13, %c0_14, %c0_15], %18 {strides = array<i32>} : memref<1x4x1xf32, #tpu.memory_space<vmem>>, vector<1x4x1xf32>,
      %c0_16 = arith.constant 0 : index
      %c0_17 = arith.constant 0 : index
      %c0_18 = arith.constant 0 : index
      %20 = vector.load %arg10[%c0_16, %c0_17, %c0_18] : memref<1x4x1xf32, #tpu.memory_space<vmem>>, vector<1x4x1xf32>
      %21 = arith.mulf %12, %12 : vector<2x4x256xf32>
      %cst_19 = arith.constant dense<0.000000e+00> : vector<2x4xf32>
      %22 = vector.multi_reduction <add>, %21, %cst_19 [2] : vector<2x4x256xf32> to vector<2x4xf32>
      %23 = vector.shape_cast %22 : vector<2x4xf32> to vector<2x4x1xf32>
      %cst_20 = arith.constant dense<0.000000e+00> : vector<4x1xf32>
      %24 = vector.multi_reduction <add>, %23, %cst_20 [0] : vector<2x4x1xf32> to vector<4x1xf32>
      %25 = vector.shape_cast %24 : vector<4x1xf32> to vector<1x4x1xf32>
      %26 = arith.addf %20, %25 : vector<1x4x1xf32>
      %c0_21 = arith.constant 0 : index
      %c0_22 = arith.constant 0 : index
      %c0_23 = arith.constant 0 : index
      %27 = vector.load %arg10[%c0_21, %c0_22, %c0_23] : memref<1x4x1xf32, #tpu.memory_space<vmem>>, vector<1x4x1xf32>
      tpu.vector_store %arg10[%c0_21, %c0_22, %c0_23], %26 {strides = array<i32>} : memref<1x4x1xf32, #tpu.memory_space<vmem>>, vector<1x4x1xf32>,
      %c0_i32_24 = arith.constant 0 : i32
      %28 = arith.cmpi eq, %arg2, %c0_i32_24 : i32
      %29 = arith.extui %28 : i1 to i32
      %c0_i32_25 = arith.constant 0 : i32
      %30 = arith.cmpi ne, %29, %c0_i32_25 : i32
      scf.if %30 {
        %c0_26 = arith.constant 0 : index
        %c0_27 = arith.constant 0 : index
        %c0_28 = arith.constant 0 : index
        %31 = vector.load %arg9[%c0_26, %c0_27, %c0_28] : memref<1x4x1xf32, #tpu.memory_space<vmem>>, vector<1x4x1xf32>
        %cst_29 = arith.constant 0.001953125 : f32
        %32 = vector.broadcast %cst_29 : f32 to vector<1x4x1xf32>
        %33 = arith.mulf %31, %32 : vector<1x4x1xf32>
        %c0_30 = arith.constant 0 : index
        %c0_31 = arith.constant 0 : index
        %c0_32 = arith.constant 0 : index
        %34 = vector.load %arg11[%c0_30, %c0_31, %c0_32] : memref<1x4x1xf32, #tpu.memory_space<vmem>>, vector<1x4x1xf32>
        %35 = arith.addf %34, %33 : vector<1x4x1xf32>
        %c0_33 = arith.constant 0 : index
        %c0_34 = arith.constant 0 : index
        %c0_35 = arith.constant 0 : index
        %36 = vector.load %arg10[%c0_33, %c0_34, %c0_35] : memref<1x4x1xf32, #tpu.memory_space<vmem>>, vector<1x4x1xf32>
        %cst_36 = arith.constant 0.001953125 : f32
        %37 = vector.broadcast %cst_36 : f32 to vector<1x4x1xf32>
        %38 = arith.mulf %36, %37 : vector<1x4x1xf32>
        %39 = arith.mulf %33, %33 : vector<1x4x1xf32>
        %40 = arith.subf %38, %39 : vector<1x4x1xf32>
        %cst_37 = arith.constant 0.000000e+00 : f32
        %41 = vector.broadcast %cst_37 : f32 to vector<1x4x1xf32>
        %42 = arith.maximumf %40, %41 : vector<1x4x1xf32>
        %cst_38 = arith.constant 9.99999974E-6 : f32
        %43 = vector.broadcast %cst_38 : f32 to vector<1x4x1xf32>
        %44 = arith.addf %42, %43 : vector<1x4x1xf32>
        %45 = math.rsqrt %44 : vector<1x4x1xf32>
        %c0_39 = arith.constant 0 : index
        %c0_40 = arith.constant 0 : index
        %c0_41 = arith.constant 0 : index
        %46 = vector.load %arg4[%c0_39, %c0_40, %c0_41] : memref<1x4x1xf32, #tpu.memory_space<vmem>>, vector<1x4x1xf32>
        %47 = arith.mulf %45, %46 : vector<1x4x1xf32>
        %c0_42 = arith.constant 0 : index
        %c0_43 = arith.constant 0 : index
        %c0_44 = arith.constant 0 : index
        %48 = vector.load %arg12[%c0_42, %c0_43, %c0_44] : memref<1x4x1xf32, #tpu.memory_space<vmem>>, vector<1x4x1xf32>
        tpu.vector_store %arg12[%c0_42, %c0_43, %c0_44], %47 {strides = array<i32>} : memref<1x4x1xf32, #tpu.memory_space<vmem>>, vector<1x4x1xf32>,
        %c0_45 = arith.constant 0 : index
        %c0_46 = arith.constant 0 : index
        %c0_47 = arith.constant 0 : index
        %49 = vector.load %arg5[%c0_45, %c0_46, %c0_47] : memref<1x4x1xf32, #tpu.memory_space<vmem>>, vector<1x4x1xf32>
        %50 = arith.mulf %35, %47 : vector<1x4x1xf32>
        %51 = arith.subf %49, %50 : vector<1x4x1xf32>
        %c0_48 = arith.constant 0 : index
        %c0_49 = arith.constant 0 : index
        %c0_50 = arith.constant 0 : index
        %52 = vector.load %arg13[%c0_48, %c0_49, %c0_50] : memref<1x4x1xf32, #tpu.memory_space<vmem>>, vector<1x4x1xf32>
        tpu.vector_store %arg13[%c0_48, %c0_49, %c0_50], %51 {strides = array<i32>} : memref<1x4x1xf32, #tpu.memory_space<vmem>>, vector<1x4x1xf32>,
        %c0_51 = arith.constant 0 : index
        %c0_52 = arith.constant 0 : index
        %c0_53 = arith.constant 0 : index
        %53 = vector.load %arg7[%c0_51, %c0_52, %c0_53] : memref<1x4x1xf32, #tpu.memory_space<vmem>>, vector<1x4x1xf32>
        tpu.vector_store %arg7[%c0_51, %c0_52, %c0_53], %35 {strides = array<i32>} : memref<1x4x1xf32, #tpu.memory_space<vmem>>, vector<1x4x1xf32>,
        %c0_54 = arith.constant 0 : index
        %c0_55 = arith.constant 0 : index
        %c0_56 = arith.constant 0 : index
        %54 = vector.load %arg8[%c0_54, %c0_55, %c0_56] : memref<1x4x1xf32, #tpu.memory_space<vmem>>, vector<1x4x1xf32>
        tpu.vector_store %arg8[%c0_54, %c0_55, %c0_56], %42 {strides = array<i32>} : memref<1x4x1xf32, #tpu.memory_space<vmem>>, vector<1x4x1xf32>,
      } else {
      }
    } else {
    }
    %c1_i32 = arith.constant 1 : i32
    %3 = arith.cmpi eq, %arg1, %c1_i32 : i32
    %4 = arith.extui %3 : i1 to i32
    %c0_i32_1 = arith.constant 0 : i32
    %5 = arith.cmpi ne, %4, %c0_i32_1 : i32
    scf.if %5 {
      %c0 = arith.constant 0 : index
      %c0_2 = arith.constant 0 : index
      %c0_3 = arith.constant 0 : index
      %6 = vector.load %arg3[%c0, %c0_2, %c0_3] : memref<2x4x256xf32, #tpu.memory_space<vmem>>, vector<2x4x256xf32>
      %c0_4 = arith.constant 0 : index
      %c0_5 = arith.constant 0 : index
      %c0_6 = arith.constant 0 : index
      %7 = vector.load %arg12[%c0_4, %c0_5, %c0_6] : memref<1x4x1xf32, #tpu.memory_space<vmem>>, vector<1x4x1xf32>
      %8 = vector.broadcast %7 : vector<1x4x1xf32> to vector<2x4x256xf32>
      %9 = arith.mulf %6, %8 : vector<2x4x256xf32>
      %c0_7 = arith.constant 0 : index
      %c0_8 = arith.constant 0 : index
      %c0_9 = arith.constant 0 : index
      %10 = vector.load %arg13[%c0_7, %c0_8, %c0_9] : memref<1x4x1xf32, #tpu.memory_space<vmem>>, vector<1x4x1xf32>
      %11 = vector.broadcast %10 : vector<1x4x1xf32> to vector<2x4x256xf32>
      %12 = arith.addf %9, %11 : vector<2x4x256xf32>
      %c0_10 = arith.constant 0 : index
      %c0_11 = arith.constant 0 : index
      %c0_12 = arith.constant 0 : index
      %13 = vector.load %arg6[%c0_10, %c0_11, %c0_12] : memref<2x4x256xf32, #tpu.memory_space<vmem>>, vector<2x4x256xf32>
      tpu.vector_store %arg6[%c0_10, %c0_11, %c0_12], %12 {strides = array<i32>} : memref<2x4x256xf32, #tpu.memory_space<vmem>>, vector<2x4x256xf32>,
    } else {
    }
    return
  }
  func.func @transform_0(%arg0: i32, %arg1: i32, %arg2: i32) -> (i32, i32, i32) {
    %c0_i32 = arith.constant 0 : i32
    %c0_i32_0 = arith.constant 0 : i32
    return %c0_i32, %arg0, %arg2 : i32, i32, i32
  }
  func.func @transform_1(%arg0: i32, %arg1: i32, %arg2: i32) -> (i32, i32, i32) {
    %c0_i32 = arith.constant 0 : i32
    %c0_i32_0 = arith.constant 0 : i32
    %c0_i32_1 = arith.constant 0 : i32
    return %c0_i32, %arg0, %c0_i32_0 : i32, i32, i32
  }
  func.func @transform_2(%arg0: i32, %arg1: i32, %arg2: i32) -> (i32, i32, i32) {
    %c0_i32 = arith.constant 0 : i32
    %c0_i32_0 = arith.constant 0 : i32
    %c0_i32_1 = arith.constant 0 : i32
    return %c0_i32, %arg0, %c0_i32_0 : i32, i32, i32
  }
  func.func @transform_3(%arg0: i32, %arg1: i32, %arg2: i32) -> (i32, i32, i32) {
    %0 = arith.muli %arg1, %arg2 : i32
    %c0_i32 = arith.constant 0 : i32
    %c0_i32_0 = arith.constant 0 : i32
    return %c0_i32, %arg0, %0 : i32, i32, i32
  }
  func.func @transform_4(%arg0: i32, %arg1: i32, %arg2: i32) -> (i32, i32, i32) {
    %c0_i32 = arith.constant 0 : i32
    %c0_i32_0 = arith.constant 0 : i32
    %c0_i32_1 = arith.constant 0 : i32
    return %c0_i32, %arg0, %c0_i32_0 : i32, i32, i32
  }
  func.func @transform_5(%arg0: i32, %arg1: i32, %arg2: i32) -> (i32, i32, i32) {
    %c0_i32 = arith.constant 0 : i32
    %c0_i32_0 = arith.constant 0 : i32
    %c0_i32_1 = arith.constant 0 : i32
    return %c0_i32, %arg0, %c0_i32_0 : i32, i32, i32
  }
}

</mosaic_0001>

<llo_original>
// kernel: tpu_custom_call.1
$region0: #{tpu_custom_call.1}
  #allocation0 [shape = 'u32[]', space=smem, size = 0x4, offset = 0x4, fixed_abs, tag = 'smem constant byte address 0x4 - core index']
  #allocation1 [shape = 'u32[72,128]{1,0:T(1,128)}', space=vmem, size = 0x9000, scoped, tag = 'internal scratch']
  #allocation2 [shape = 'f32[1,4,1]{2,1,0:T(4,128)}', space=vmem, size = 0x800, scoped, tag = 'scratch operand']
  #allocation3 [shape = 'f32[1,4,1]{2,1,0:T(4,128)}', space=vmem, size = 0x800, scoped, tag = 'scratch operand']
  #allocation4 [shape = 'f32[1,4,1]{2,1,0:T(4,128)}', space=vmem, size = 0x800, scoped, tag = 'scratch operand']
  #allocation5 [shape = 'f32[1,4,1]{2,1,0:T(4,128)}', space=vmem, size = 0x800, scoped, tag = 'scratch operand']
  #allocation6 [shape = 'f32[1,4,1]{2,1,0:T(4,128)}', space=vmem, size = 0x800, scoped, tag = 'scratch operand']
  %s0 = inlined_call_operand.hbm [shape: f32[2,4,256], index: 0, kind: input, shape index: {}]
  %s1 = inlined_call_operand.vmem [shape: f32[1,4,1], index: 1, kind: input, shape index: {}]
  %s2 = inlined_call_operand.vmem [shape: f32[1,4,1], index: 2, kind: input, shape index: {}]
  %s3 = inlined_call_operand.hbm [shape: f32[2,4,256], index: 3, kind: output, shape index: {0}]
  %s4 = inlined_call_operand.vmem [shape: f32[1,4,1], index: 4, kind: output, shape index: {1}]
  %s5 = inlined_call_operand.vmem [shape: f32[1,4,1], index: 5, kind: output, shape index: {2}]
  %6 = xla_tuple %s3, %s4, %s5
  %s7 = sld [smem:[#allocation0]]
  $region81: #{tpu_custom_call.1} parent=0
    _
  %s9 = ssub.s32 1, %s7
  %s10 = scalar_select 0, %s9, %s7
  $region1: #{tpu_custom_call.1} parent=0
    #allocation7 [shape = 'u8[8192]{0}', space=vmem, size = 0x2000, scoped, tag = 'input window, operand 0, single buffered']
    #allocation8 [shape = 's32[2]{0}', space=sflag, size = 0x8, scoped, tag = 'scoped memory for tpu_custom_call.1']
    #allocation9 [shape = 's32[2]{0}', space=sflag, size = 0x8, scoped, tag = 'scoped memory for tpu_custom_call.1']
    #allocation10 [shape = 'u8[16384]{0}', space=vmem, size = 0x4000, scoped, tag = 'output window, operand 0']
    %11 = vsyncpa [#allocation8], 0
    %12 = vsyncpa [#allocation9], 0
    %s13 = scalar_lea.sflag [#allocation9], 1
    %14 = vsyncpa %s13, 0
    loop: start=0, step=1, limit=4
    $region2: #{tpu_custom_call.1} parent=1 // loop_pre_header
      _
    $region3: #{tpu_custom_call.1} parent=1 // loop_header
      %s16 = sphi 0, %s20
      %p17 = scmp.ge.s32.totalorder %s16, 4
      %s23 = sphi 0, %s42
      %s24 = sphi 0, %s38
      %s25 = sphi 0, %s34
      %s26 = sphi 0, %s23
      %s27 = sphi 0, %s24
      %s28 = sphi 0, %s25
      %s29 = sphi 0, %s26
      %s30 = sphi 0, %s27
      %s31 = sphi 0, %s28
      %s47 = sphi 0, %s49
      %s50 = sphi 0, %s47
      %s51 = sphi 0, %s50
      %s67 = sphi 0, %s51
      %s73 = sphi 0, %s75
      %s76 = sphi 0, %s73
      %s77 = sphi 0, %s76
      %s93 = sphi 0, %s77
      %s99 = sphi 0, %s101
      %s102 = sphi 0, %s99
      %s103 = sphi 0, %s102
      %s119 = sphi 0, %s103
      %s129 = sphi 0, %s131
      %s132 = sphi 0, %s129
      %s133 = sphi 0, %s132
      %s149 = sphi 0, %s133
      %s155 = sphi 0, %s157
      %s158 = sphi 0, %s155
      %s159 = sphi 0, %s158
      %s175 = sphi 0, %s159
      %s181 = sphi 0, %s183
      %s184 = sphi 0, %s181
      %s185 = sphi 0, %s184
      %s201 = sphi 0, %s185
    $region4: #{tpu_custom_call.1} parent=1 // loop_header_branch
      %19 = sbr.rel (%p17) target = $region8
    $region5: #{tpu_custom_call.1} parent=1 // loop_body
      %s21 = ssub.s32 %s16, 1
      %s22 = ssub.s32 %s16, 2
      %s32 = sadd.s32 1, %s25
      %p33 = scmp.ge.s32.totalorder %s32, 1
      %s34 = scalar_select %p33, 0, %s32
      %s35 = sadd.s32 1, %s24
      %s36 = scalar_select %p33, %s35, %s24
      %p37 = scmp.ge.s32.totalorder %s36, 2
      %s38 = scalar_select %p37, 0, %s36
      %s39 = sadd.s32 1, %s23
      %s40 = scalar_select %p37, %s39, %s23
      %p41 = scmp.ge.s32.totalorder %s40, 1
      %s42 = scalar_select %p41, 0, %s40
      %s43 = ssub.s32 %s23, %s42
      %s44 = ssub.s32 %s25, %s34
      %s45 = sor.u32 %s43, %s44
      %p46 = scmp.eq.s32.totalorder %s45, 0
      %s48 = sadd.s32 %s47, 1
      %s49 = scalar_select %p46, %s47, %s48
      %p52 = pneg %p46
      %p53 = scmp.eq.s32.totalorder %s16, 1
      %p54 = por %p52, %p53
      %p55 = scmp.ne.s32.totalorder %s47, %s50
      %p56 = scmp.eq.s32.totalorder %s16, 0
      %p57 = por %p55, %p56
      %p58 = scmp.ne.s32.totalorder %s47, %s50
      %p59 = scmp.eq.s32.totalorder %s21, 1
      %p60 = por %p58, %p59
      %p61 = scmp.ne.s32.totalorder %s50, %s51
      %p62 = scmp.eq.s32.totalorder %s21, 0
      %p63 = por %p61, %p62
      %p64 = scmp.ne.s32.totalorder %s50, %s51
      %p65 = scmp.eq.s32.totalorder %s22, 1
      %p66 = por %p64, %p65
      %p68 = scmp.ne.s32.totalorder %s51, %s67
      %p69 = scmp.eq.s32.totalorder %s22, 0
      %p70 = por %p68, %p69
      %s71 = ssub.s32 %s23, %s42
      %p72 = scmp.eq.s32.totalorder %s71, 0
      %s74 = sadd.s32 %s73, 1
      %s75 = scalar_select %p72, %s73, %s74
      %p78 = pneg %p72
      %p79 = scmp.eq.s32.totalorder %s16, 1
      %p80 = por %p78, %p79
      %p81 = scmp.ne.s32.totalorder %s73, %s76
      %p82 = scmp.eq.s32.totalorder %s16, 0
      %p83 = por %p81, %p82
      %p84 = scmp.ne.s32.totalorder %s73, %s76
      %p85 = scmp.eq.s32.totalorder %s21, 1
      %p86 = por %p84, %p85
      %p87 = scmp.ne.s32.totalorder %s76, %s77
      %p88 = scmp.eq.s32.totalorder %s21, 0
      %p89 = por %p87, %p88
      %p90 = scmp.ne.s32.totalorder %s76, %s77
      %p91 = scmp.eq.s32.totalorder %s22, 1
      %p92 = por %p90, %p91
      %p94 = scmp.ne.s32.totalorder %s77, %s93
      %p95 = scmp.eq.s32.totalorder %s22, 0
      %p96 = por %p94, %p95
      %s97 = ssub.s32 %s23, %s42
      %p98 = scmp.eq.s32.totalorder %s97, 0
      %s100 = sadd.s32 %s99, 1
      %s101 = scalar_select %p98, %s99, %s100
      %p104 = pneg %p98
      %p105 = scmp.eq.s32.totalorder %s16, 1
      %p106 = por %p104, %p105
      %p107 = scmp.ne.s32.totalorder %s99, %s102
      %p108 = scmp.eq.s32.totalorder %s16, 0
      %p109 = por %p107, %p108
      %p110 = scmp.ne.s32.totalorder %s99, %s102
      %p111 = scmp.eq.s32.totalorder %s21, 1
      %p112 = por %p110, %p111
      %p113 = scmp.ne.s32.totalorder %s102, %s103
      %p114 = scmp.eq.s32.totalorder %s21, 0
      %p115 = por %p113, %p114
      %p116 = scmp.ne.s32.totalorder %s102, %s103
      %p117 = scmp.eq.s32.totalorder %s22, 1
      %p118 = por %p116, %p117
      %p120 = scmp.ne.s32.totalorder %s103, %s119
      %p121 = scmp.eq.s32.totalorder %s22, 0
      %p122 = por %p120, %p121
      %s123 = smul.u32 %s24, %s25
      %s124 = smul.u32 %s38, %s34
      %s125 = ssub.s32 %s23, %s42
      %s126 = ssub.s32 %s123, %s124
      %s127 = sor.u32 %s125, %s126
      %p128 = scmp.eq.s32.totalorder %s127, 0
      %s130 = sadd.s32 %s129, 1
      %s131 = scalar_select %p128, %s129, %s130
      %p134 = pneg %p128
      %p135 = scmp.eq.s32.totalorder %s16, 1
      %p136 = por %p134, %p135
      %p137 = scmp.ne.s32.totalorder %s129, %s132
      %p138 = scmp.eq.s32.totalorder %s16, 0
      %p139 = por %p137, %p138
      %p140 = scmp.ne.s32.totalorder %s129, %s132
      %p141 = scmp.eq.s32.totalorder %s21, 1
      %p142 = por %p140, %p141
      %p143 = scmp.ne.s32.totalorder %s132, %s133
      %p144 = scmp.eq.s32.totalorder %s21, 0
      %p145 = por %p143, %p144
      %p146 = scmp.ne.s32.totalorder %s132, %s133
      %p147 = scmp.eq.s32.totalorder %s22, 1
      %p148 = por %p146, %p147
      %p150 = scmp.ne.s32.totalorder %s133, %s149
      %p151 = scmp.eq.s32.totalorder %s22, 0
      %p152 = por %p150, %p151
      %s153 = ssub.s32 %s23, %s42
      %p154 = scmp.eq.s32.totalorder %s153, 0
      %s156 = sadd.s32 %s155, 1
      %s157 = scalar_select %p154, %s155, %s156
      %p160 = pneg %p154
      %p161 = scmp.eq.s32.totalorder %s16, 1
      %p162 = por %p160, %p161
      %p163 = scmp.ne.s32.totalorder %s155, %s158
      %p164 = scmp.eq.s32.totalorder %s16, 0
      %p165 = por %p163, %p164
      %p166 = scmp.ne.s32.totalorder %s155, %s158
      %p167 = scmp.eq.s32.totalorder %s21, 1
      %p168 = por %p166, %p167
      %p169 = scmp.ne.s32.totalorder %s158, %s159
      %p170 = scmp.eq.s32.totalorder %s21, 0
      %p171 = por %p169, %p170
      %p172 = scmp.ne.s32.totalorder %s158, %s159
      %p173 = scmp.eq.s32.totalorder %s22, 1
      %p174 = por %p172, %p173
      %p176 = scmp.ne.s32.totalorder %s159, %s175
      %p177 = scmp.eq.s32.totalorder %s22, 0
      %p178 = por %p176, %p177
      %s179 = ssub.s32 %s23, %s42
      %p180 = scmp.eq.s32.totalorder %s179, 0
      %s182 = sadd.s32 %s181, 1
      %s183 = scalar_select %p180, %s181, %s182
      %p186 = pneg %p180
      %p187 = scmp.eq.s32.totalorder %s16, 1
      %p188 = por %p186, %p187
      %p189 = scmp.ne.s32.totalorder %s181, %s184
      %p190 = scmp.eq.s32.totalorder %s16, 0
      %p191 = por %p189, %p190
      %p192 = scmp.ne.s32.totalorder %s181, %s184
      %p193 = scmp.eq.s32.totalorder %s21, 1
      %p194 = por %p192, %p193
      %p195 = scmp.ne.s32.totalorder %s184, %s185
      %p196 = scmp.eq.s32.totalorder %s21, 0
      %p197 = por %p195, %p196
      %p198 = scmp.ne.s32.totalorder %s184, %s185
      %p199 = scmp.eq.s32.totalorder %s22, 1
      %p200 = por %p198, %p199
      %p202 = scmp.ne.s32.totalorder %s185, %s201
      %p203 = scmp.eq.s32.totalorder %s22, 0
      %p204 = por %p202, %p203
      %p205 = scmp.le.s32.totalorder 1, %s16
      %p206 = scmp.lt.s32.totalorder %s16, 3
      %p207 = pnand %p205, %p206
      %p208 = pneg %p207
      // Predicated region
      $region9: #{tpu_custom_call.1} parent=5 // pred_check
        _
      $region10: #{tpu_custom_call.1} parent=5 // pred_check_branch
        %210 = sbr.rel (%p207) target = $region12
      $region11: #{tpu_custom_call.1} parent=5 // pred_region
        %s211 = ssub.s32 %s16, 1
        // Predicated region
        $region13: #{tpu_custom_call.1} parent=11 // pred_check
          %p212 = pneg %p63
        $region14: #{tpu_custom_call.1} parent=11 // pred_check_branch
          %214 = sbr.rel (%p212) target = $region16
        $region15: #{tpu_custom_call.1} parent=11 // pred_region
          %s215 = smul.u32 2, %s28
          %217 = vsyncadd [#allocation8], 0
          %s218 = smul.addr %s26, 2
          %s219 = sadd.s32 %s215, %s218
          %s220 = smul.addr %s219, 4
          %s221 = scalar_lea.hbm %s0, %s220
          %s222 = sshll.u32 %s221, 4
          %s223 = int_to_ptr.hbm [resolvable:$true] %s222
          %s224 = sshll.u32 [#allocation7], 4
          %s225 = int_to_ptr.vmem [resolvable:$true] %s224
          %230 = dma.hbm_to_vmem [thread:$0]  %s223, 256, %s225, [#allocation8], 128, 128, 8
        $region16: #{tpu_custom_call.1} parent=11 // pred_fallthru
          _
        // Predicated region
        $region17: #{tpu_custom_call.1} parent=11 // pred_check
          %p231 = pneg %p89
        $region18: #{tpu_custom_call.1} parent=11 // pred_check_branch
          %233 = sbr.rel (%p231) target = $region20
        $region19: #{tpu_custom_call.1} parent=11 // pred_region
          %p234 = scmp.lt.s32.totalorder %s26, 0
          %s235 = scalar_select %p234, %s26, 0
          %s236 = smul.addr %s235, 4
          %s237 = scalar_lea.vmem %s1, %s236
        $region20: #{tpu_custom_call.1} parent=11 // pred_fallthru
          _
        // Predicated region
        $region21: #{tpu_custom_call.1} parent=11 // pred_check
          %p238 = pneg %p115
        $region22: #{tpu_custom_call.1} parent=11 // pred_check_branch
          %240 = sbr.rel (%p238) target = $region24
        $region23: #{tpu_custom_call.1} parent=11 // pred_region
          %p241 = scmp.lt.s32.totalorder %s26, 0
          %s242 = scalar_select %p241, %s26, 0
          %s243 = smul.addr %s242, 4
          %s244 = scalar_lea.vmem %s2, %s243
        $region24: #{tpu_custom_call.1} parent=11 // pred_fallthru
          _
      $region12: #{tpu_custom_call.1} parent=5 // pred_fallthru
        _
      %p245 = scmp.lt.s32.totalorder %s16, 2
      // Predicated region
      $region25: #{tpu_custom_call.1} parent=5 // pred_check
        %p246 = pneg %p245
      $region26: #{tpu_custom_call.1} parent=5 // pred_check_branch
        %248 = sbr.rel (%p246) target = $region28
      $region27: #{tpu_custom_call.1} parent=5 // pred_region
        _
      $region28: #{tpu_custom_call.1} parent=5 // pred_fallthru
        _
      %p249 = scmp.le.s32.totalorder 1, %s16
      %p250 = scmp.lt.s32.totalorder %s16, 3
      %p251 = pnand %p249, %p250
      %p252 = pneg %p251
      // Predicated region
      $region29: #{tpu_custom_call.1} parent=5 // pred_check
        _
      $region30: #{tpu_custom_call.1} parent=5 // pred_check_branch
        %254 = sbr.rel (%p251) target = $region32
      $region31: #{tpu_custom_call.1} parent=5 // pred_region
        %s255 = ssub.s32 %s16, 1
        // Predicated region
        $region33: #{tpu_custom_call.1} parent=31 // pred_check
          %p256 = pneg %p63
        $region34: #{tpu_custom_call.1} parent=31 // pred_check_branch
          %258 = sbr.rel (%p256) target = $region36
        $region35: #{tpu_custom_call.1} parent=31 // pred_region
          %260 = dma.done [#allocation8], 256
        $region36: #{tpu_custom_call.1} parent=31 // pred_fallthru
          _
        %p261 = pneg %p63
        %p262 = pneg %p60
        %p263 = scmp.lt.s32.totalorder %s26, 0
        %s264 = scalar_select %p263, %s26, 0
        %s265 = smul.addr %s264, 4
        %s266 = scalar_lea.vmem %s1, %s265
        %p267 = pneg %p89
        %p268 = pneg %p86
        %p269 = scmp.lt.s32.totalorder %s26, 0
        %s270 = scalar_select %p269, %s26, 0
        %s271 = smul.addr %s270, 4
        %s272 = scalar_lea.vmem %s2, %s271
        %p273 = pneg %p115
        %p274 = pneg %p112
        %p275 = pneg %p145
        %p276 = pneg %p142
        %s277 = sand.u32 %s132, 1
        %s278 = scalar_lea.sflag [#allocation9], %s277
        %s279 = sand.u32 %s132, 1
        %s280 = smul.addr %s279, 16
        %s281 = scalar_lea.vmem [#allocation10], %s280
        %p282 = pneg %p171
        %p283 = pneg %p168
        %p284 = scmp.lt.s32.totalorder %s26, 0
        %s285 = scalar_select %p284, %s26, 0
        %s286 = smul.addr %s285, 4
        %s287 = scalar_lea.vmem %s4, %s286
        %p288 = pneg %p197
        %p289 = pneg %p194
        %p290 = scmp.lt.s32.totalorder %s26, 0
        %s291 = scalar_select %p290, %s26, 0
        %s292 = smul.addr %s291, 4
        %s293 = scalar_lea.vmem %s5, %s292
        %s294 = smul.u32 2, %s28
        %p295 = scmp.lt.s32.totalorder %s26, 0
        %s296 = scalar_select %p295, %s26, 0
        %s297 = smul.addr %s296, 4
        %s298 = scalar_lea.vmem %s1, %s297
        %p299 = scmp.lt.s32.totalorder %s26, 0
        %s300 = scalar_select %p299, %s26, 0
        %s301 = smul.addr %s300, 4
        %s302 = scalar_lea.vmem %s2, %s301
        %s303 = smul.u32 %s27, %s28
        %s304 = smul.u32 2, %s303
        %p305 = scmp.lt.s32.totalorder %s26, 0
        %s306 = scalar_select %p305, %s26, 0
        %s307 = smul.addr %s306, 4
        %s308 = scalar_lea.vmem %s4, %s307
        %p309 = scmp.lt.s32.totalorder %s26, 0
        %s310 = scalar_select %p309, %s26, 0
        %s311 = smul.addr %s310, 4
        %s312 = scalar_lea.vmem %s5, %s311
        %p313 = scmp.eq.s32.totalorder %s27, 0
        // Predicated region
        $region37: #{tpu_custom_call.1} parent=31 // pred_check
          %p314 = pneg %p313
        $region38: #{tpu_custom_call.1} parent=31 // pred_check_branch
          %316 = sbr.rel (%p314) target = $region40
        $region39: #{tpu_custom_call.1} parent=31 // pred_region
          %p317 = scmp.eq.s32.totalorder %s28, 0
          // Predicated region
          $region41: #{tpu_custom_call.1} parent=39 // pred_check
            %p318 = pneg %p317
          $region42: #{tpu_custom_call.1} parent=39 // pred_check_branch
            %320 = sbr.rel (%p318) target = $region44
          $region43: #{tpu_custom_call.1} parent=39 // pred_region
            %v321 = vld [vmem:[#allocation7] sm:$0xff]
            %323 = vst [vmem:[#allocation1] ss:$2 sm:$0xff] %v321
            %v324 = vld.sshfl [vmem:[#allocation1] sm:$0xff pattern:$0x75316420]
            %v325 = vld.sshfl [vmem:[#allocation1 + $0x8] sm:$0xff pattern:$0x75316420]
            %vm328 = vcmask 1043456
            %v329 = vsel %vm328, %v324, 0.0
            %v330 = vsel %vm328, %v325, 0.0
            %v331 = vadd.f32 %v329, %v330
            %332 = vadd.xlane.f32.xlu0 %v331
            %v333 = vpop.xlane.xlu0 %332
            %v334 = vmul.f32 %v333, 0.00390625
            %vm335 = vcmask 3072
            %336 = vst.msk [vmem:[#allocation4] sm:$0xf] %vm335, %v334
            %337 = vst.msk [vmem:[#allocation2] sm:$0xf] %vm335, 0.0
            %338 = vst.msk [vmem:[#allocation3] sm:$0xf] %vm335, 0.0
          $region44: #{tpu_custom_call.1} parent=39 // pred_fallthru
            _
          %v339 = vld [vmem:[#allocation7] sm:$0xff]
          %v340 = vld [vmem:[#allocation7 + $0x8] sm:$0xff]
          %v341 = vld [vmem:[#allocation4] sm:$0xf]
          %343 = vset.pattern.permute.xlu0 0
          %344 = vperm.xlu0 %343, %v341
          %v345 = vpop.permute.xlu0 %344
          %v347 = vunpack.c.l.s4 839922192
          %v348 = vunpack.c.0.s8 %v347
          %v349 = vperm.slane %v345, %v348
          %v351 = vsub.f32 %v339, %v349
          %v352 = vsub.f32 %v340, %v349
          %v353 = vld [vmem:[#allocation2] sm:$0xf]
          %356 = vst [vmem:[#allocation1] ss:$2 sm:$0xff] %v351
          %v357 = vld.sshfl [vmem:[#allocation1] sm:$0xff pattern:$0x75316420]
          %v358 = vld.sshfl [vmem:[#allocation1 + $0x8] sm:$0xff pattern:$0x75316420]
          %s359 = scalar_lea.vmem [#allocation1], 16
          %360 = vst [vmem:[%s359] ss:$2 sm:$0xff] %v352
          %v361 = vld.sshfl [vmem:[#allocation1 + $0x10] sm:$0xff pattern:$0x75316420]
          %v362 = vld.sshfl [vmem:[#allocation1 + $0x18] sm:$0xff pattern:$0x75316420]
          %vm367 = vcmask 1043456
          %v368 = vsel %vm367, %v357, 0.0
          %v369 = vsel %vm367, %v358, 0.0
          %v370 = vadd.f32 %v368, %v369
          %371 = vadd.xlane.f32.xlu0 %v370
          %v372 = vpop.xlane.xlu0 %371
          %v373 = vsel %vm367, %v361, 0.0
          %v374 = vsel %vm367, %v362, 0.0
          %v375 = vadd.f32 %v373, %v374
          %376 = vadd.xlane.f32.xlu0 %v375
          %v377 = vpop.xlane.xlu0 %376
          %v378 = vsel %vm367, %v372, 0.0
          %v379 = vsel %vm367, %v377, 0.0
          %v380 = vadd.f32 %v378, %v379
          %v381 = vadd.f32 %v353, %v380
          %vm382 = vcmask 3072
          %383 = vst.msk [vmem:[#allocation2] sm:$0xf] %vm382, %v381
          %v384 = vld [vmem:[#allocation3] sm:$0xf]
          %v385 = vmul.f32 %v351, %v351
          %v386 = vmul.f32 %v352, %v352
          %389 = vst [vmem:[#allocation1] ss:$2 sm:$0xff] %v385
          %v390 = vld.sshfl [vmem:[#allocation1] sm:$0xff pattern:$0x75316420]
          %v391 = vld.sshfl [vmem:[#allocation1 + $0x8] sm:$0xff pattern:$0x75316420]
          %s392 = scalar_lea.vmem [#allocation1], 16
          %393 = vst [vmem:[%s392] ss:$2 sm:$0xff] %v386
          %v394 = vld.sshfl [vmem:[#allocation1 + $0x10] sm:$0xff pattern:$0x75316420]
          %v395 = vld.sshfl [vmem:[#allocation1 + $0x18] sm:$0xff pattern:$0x75316420]
          %v400 = vsel %vm367, %v390, 0.0
          %v401 = vsel %vm367, %v391, 0.0
          %v402 = vadd.f32 %v400, %v401
          %403 = vadd.xlane.f32.xlu0 %v402
          %v404 = vpop.xlane.xlu0 %403
          %v405 = vsel %vm367, %v394, 0.0
          %v406 = vsel %vm367, %v395, 0.0
          %v407 = vadd.f32 %v405, %v406
          %408 = vadd.xlane.f32.xlu0 %v407
          %v409 = vpop.xlane.xlu0 %408
          %v410 = vsel %vm367, %v404, 0.0
          %v411 = vsel %vm367, %v409, 0.0
          %v412 = vadd.f32 %v410, %v411
          %v413 = vadd.f32 %v384, %v412
          %414 = vst.msk [vmem:[#allocation3] sm:$0xf] %vm382, %v413
          // Predicated region
          $region45: #{tpu_custom_call.1} parent=39 // pred_check
            %p415 = pneg %p317
          $region46: #{tpu_custom_call.1} parent=39 // pred_check_branch
            %417 = sbr.rel (%p415) target = $region48
          $region47: #{tpu_custom_call.1} parent=39 // pred_region
            %v418 = vld [vmem:[#allocation2] sm:$0xf]
            %v419 = vmul.f32 %v418, 0.001953125
            %v420 = vld [vmem:[#allocation4] sm:$0xf]
            %v421 = vadd.f32 %v420, %v419
            %v422 = vld [vmem:[#allocation3] sm:$0xf]
            %v423 = vmul.f32 %v422, 0.001953125
            %v424 = vmul.f32 %v419, %v419
            %v425 = vsub.f32 %v423, %v424
            %v426 = vmax.f32 %v425, 0.0
            %v427 = vadd.f32 %v426, 1e-05
            %v428 = vrsqrt.pop %v427
            %v429 = vmul.f32 %v428, %v427
            %v430 = vmul.f32 %v429, %v428
            %v431 = vmul.f32 0.5, %v430
            %v432 = vsub.f32 1.5, %v431
            %v433 = vmul.f32 %v428, %v432
            %vm434 = vweird.f32 %v427
            %vm435 = vweird.f32 %v428
            %vm436 = vmor %vm434, %vm435
            %v437 = vsel %vm436, %v428, %v433
            %v438 = vld [vmem:[%s298] sm:$0xf]
            %v439 = vmul.f32 %v437, %v438
            %440 = vst.msk [vmem:[#allocation5] sm:$0xf] %vm382, %v439
            %v441 = vld [vmem:[%s302] sm:$0xf]
            %v442 = vmul.f32 %v421, %v439
            %v443 = vsub.f32 %v441, %v442
            %444 = vst.msk [vmem:[#allocation6] sm:$0xf] %vm382, %v443
            %445 = vst.msk [vmem:[%s308] sm:$0xf] %vm382, %v421
            %446 = vst.msk [vmem:[%s312] sm:$0xf] %vm382, %v426
          $region48: #{tpu_custom_call.1} parent=39 // pred_fallthru
            _
        $region40: #{tpu_custom_call.1} parent=31 // pred_fallthru
          _
        %p447 = scmp.eq.s32.totalorder %s27, 1
        // Predicated region
        $region49: #{tpu_custom_call.1} parent=31 // pred_check
          %p448 = pneg %p447
        $region50: #{tpu_custom_call.1} parent=31 // pred_check_branch
          %450 = sbr.rel (%p448) target = $region52
        $region51: #{tpu_custom_call.1} parent=31 // pred_region
          %v451 = vld [vmem:[#allocation7] sm:$0xff]
          %v452 = vld [vmem:[#allocation7 + $0x8] sm:$0xff]
          %v453 = vld [vmem:[#allocation5] sm:$0xf]
          %455 = vset.pattern.permute.xlu0 0
          %456 = vperm.xlu0 %455, %v453
          %v457 = vpop.permute.xlu0 %456
          %v459 = vunpack.c.l.s4 839922192
          %v460 = vunpack.c.0.s8 %v459
          %v461 = vperm.slane %v457, %v460
          %v463 = vmul.f32 %v451, %v461
          %v464 = vmul.f32 %v452, %v461
          %v465 = vld [vmem:[#allocation6] sm:$0xf]
          %467 = vset.pattern.permute.xlu0 0
          %468 = vperm.xlu0 %467, %v465
          %v469 = vpop.permute.xlu0 %468
          %v471 = vunpack.c.l.s4 839922192
          %v472 = vunpack.c.0.s8 %v471
          %v473 = vperm.slane %v469, %v472
          %v475 = vadd.f32 %v463, %v473
          %v476 = vadd.f32 %v464, %v473
          %477 = vst [vmem:[%s281] sm:$0xff] %v475
          %478 = vst [vmem:[%s281 + $0x8] sm:$0xff] %v476
        $region52: #{tpu_custom_call.1} parent=31 // pred_fallthru
          _
        %s479 = sand.u32 %s132, 1
        %s480 = scalar_lea.sflag [#allocation9], %s479
        %s481 = sand.u32 %s132, 1
        %s482 = smul.addr %s481, 16
        %s483 = scalar_lea.vmem [#allocation10], %s482
        %p484 = scmp.lt.s32.totalorder %s26, 0
        %s485 = scalar_select %p484, %s26, 0
        %s486 = smul.addr %s485, 4
        %s487 = scalar_lea.vmem %s4, %s486
        %p488 = scmp.lt.s32.totalorder %s26, 0
        %s489 = scalar_select %p488, %s26, 0
        %s490 = smul.addr %s489, 4
        %s491 = scalar_lea.vmem %s5, %s490
        // Predicated region
        $region53: #{tpu_custom_call.1} parent=31 // pred_check
          %p492 = pneg %p142
        $region54: #{tpu_custom_call.1} parent=31 // pred_check_branch
          %494 = sbr.rel (%p492) target = $region56
        $region55: #{tpu_custom_call.1} parent=31 // pred_region
          %s495 = smul.u32 %s27, %s28
          %s496 = smul.u32 2, %s495
          %498 = vsyncadd %s480, 0
          %s499 = smul.addr %s26, 2
          %s500 = sadd.s32 %s496, %s499
          %s501 = smul.addr %s500, 4
          %s502 = scalar_lea.hbm %s3, %s501
          %s503 = sshll.u32 %s483, 4
          %s504 = int_to_ptr.vmem [resolvable:$true] %s503
          %s505 = sshll.u32 %s502, 4
          %s506 = int_to_ptr.hbm [resolvable:$true] %s505
          %511 = dma.vmem_to_hbm [thread:$0]  %s504, 256, %s506, %s480, 128, 128, 8
        $region56: #{tpu_custom_call.1} parent=31 // pred_fallthru
          _
        // Predicated region
        $region57: #{tpu_custom_call.1} parent=31 // pred_check
          %p512 = pneg %p168
        $region58: #{tpu_custom_call.1} parent=31 // pred_check_branch
          %514 = sbr.rel (%p512) target = $region60
        $region59: #{tpu_custom_call.1} parent=31 // pred_region
          _
        $region60: #{tpu_custom_call.1} parent=31 // pred_fallthru
          _
        // Predicated region
        $region61: #{tpu_custom_call.1} parent=31 // pred_check
          %p515 = pneg %p194
        $region62: #{tpu_custom_call.1} parent=31 // pred_check_branch
          %517 = sbr.rel (%p515) target = $region64
        $region63: #{tpu_custom_call.1} parent=31 // pred_region
          _
        $region64: #{tpu_custom_call.1} parent=31 // pred_fallthru
          _
        // Predicated region
        $region65: #{tpu_custom_call.1} parent=31 // pred_check
          %p518 = pneg %p168
        $region66: #{tpu_custom_call.1} parent=31 // pred_check_branch
          %520 = sbr.rel (%p518) target = $region68
        $region67: #{tpu_custom_call.1} parent=31 // pred_region
          %p521 = scmp.lt.s32.totalorder %s26, 0
          %s522 = scalar_select %p521, %s26, 0
          %s523 = smul.addr %s522, 4
          %s524 = scalar_lea.vmem %s4, %s523
        $region68: #{tpu_custom_call.1} parent=31 // pred_fallthru
          _
        // Predicated region
        $region69: #{tpu_custom_call.1} parent=31 // pred_check
          %p525 = pneg %p194
        $region70: #{tpu_custom_call.1} parent=31 // pred_check_branch
          %527 = sbr.rel (%p525) target = $region72
        $region71: #{tpu_custom_call.1} parent=31 // pred_region
          %p528 = scmp.lt.s32.totalorder %s26, 0
          %s529 = scalar_select %p528, %s26, 0
          %s530 = smul.addr %s529, 4
          %s531 = scalar_lea.vmem %s5, %s530
        $region72: #{tpu_custom_call.1} parent=31 // pred_fallthru
          _
      $region32: #{tpu_custom_call.1} parent=5 // pred_fallthru
        _
      %p532 = scmp.le.s32.totalorder 2, %s16
      // Predicated region
      $region73: #{tpu_custom_call.1} parent=5 // pred_check
        %p533 = pneg %p532
      $region74: #{tpu_custom_call.1} parent=5 // pred_check_branch
        %535 = sbr.rel (%p533) target = $region76
      $region75: #{tpu_custom_call.1} parent=5 // pred_region
        %s536 = ssub.s32 %s16, 2
        // Predicated region
        $region77: #{tpu_custom_call.1} parent=75 // pred_check
          %p537 = pneg %p148
        $region78: #{tpu_custom_call.1} parent=75 // pred_check_branch
          %539 = sbr.rel (%p537) target = $region80
        $region79: #{tpu_custom_call.1} parent=75 // pred_region
          %s540 = sand.u32 %s133, 1
          %s541 = scalar_lea.sflag [#allocation9], %s540
          %s542 = sand.u32 %s133, 1
          %s543 = smul.addr %s542, 16
          %s544 = scalar_lea.vmem [#allocation10], %s543
          %546 = dma.done %s541, 256
        $region80: #{tpu_custom_call.1} parent=75 // pred_fallthru
          _
      $region76: #{tpu_custom_call.1} parent=5 // pred_fallthru
        _
    $region6: #{tpu_custom_call.1} parent=1 // loop_footer
      %s20 = sadd.s32 1, %s16
    $region7: #{tpu_custom_call.1} parent=1 // loop_footer_branch
      %15 = sbr.rel target = $region3
    $region8: #{tpu_custom_call.1} parent=1 // loop_exit
      _
    %547 = vsyncpa [#allocation8], 1
    %s548 = scalar_lea.sflag [#allocation8], 1
    %549 = vsyncpa %s548, 1
    %550 = vsyncpa [#allocation9], 1
    %s551 = scalar_lea.sflag [#allocation9], 1
    %552 = vsyncpa %s551, 1

</llo_original>
